<compile_context>
chip_gen: v6e
topology: v6e:2x2x1
jax: 0.10.0
libtpu: 0.0.40
codegen_flags: <defaults>
</compile_context>

<pallas_src>
import functools
import math

import jax
import jax.numpy as jnp
from jax.experimental import pallas as pl
from jax.experimental.pallas import tpu as pltpu


def _lpe_kernel(lens_ref, seed_ref, *refs, factor, dropout_p, use_dropout,
                residual, tile_t, total_t, d_model):
    """One (time-tile, batch) block: out = W[pos] (+ factor*x) (+ dropout)."""
    if residual:
        x_ref, wslab_ref, w0_ref, o_ref = refs
    else:
        wslab_ref, w0_ref, o_ref = refs

    j = pl.program_id(0)                 # time-tile index
    b = pl.program_id(1)                 # batch index
    t0 = j * tile_t
    length = lens_ref[b]                 # scalar int32 from SMEM

    # Row r of this tile corresponds to 0-based time index t0+r; it is a real
    # token iff t0+r < input_lens[b]; otherwise its position id is 0 -> W[0].
    row = jax.lax.broadcasted_iota(jnp.int32, (tile_t, 1), 0) + t0
    valid = row < length                                          # (tile_t, 1)

    # Structured "gather": contiguous slab tile of W[1:T+1] vs padding row W[0].
    # (Does NOT rely on W[0] being zero.)
    emb = jnp.where(valid,
                    wslab_ref[...].astype(jnp.float32),
                    w0_ref[...].astype(jnp.float32))              # (tile_t, D)

    if residual:
        out = emb + jnp.float32(factor) * x_ref[...].astype(jnp.float32)
    else:
        out = emb

    if use_dropout and dropout_p > 0.0:
        # TODO(synk): torch's dropout RNG stream cannot be reproduced bit-exactly;
        # we use a deterministic stateless hash of (seed, global element index),
        # so the mask is independent of the tiling choice.
        seed = seed_ref[0].astype(jnp.uint32)
        base = (b * total_t + t0).astype(jnp.uint32)
        r_idx = jax.lax.broadcasted_iota(
            jnp.int32, (tile_t, d_model), 0).astype(jnp.uint32)
        c_idx = jax.lax.broadcasted_iota(
            jnp.int32, (tile_t, d_model), 1).astype(jnp.uint32)
        gidx = (base + r_idx) * jnp.uint32(d_model) + c_idx
        h = gidx * jnp.uint32(0x9E3779B1) + seed * jnp.uint32(0x85EBCA77)
        h = (h ^ (h >> 16)) * jnp.uint32(0x7FEB352D)
        h = (h ^ (h >> 15)) * jnp.uint32(0x846CA68B)
        h = h ^ (h >> 16)
        u = (h >> 9).astype(jnp.float32) * jnp.float32(1.0 / (1 << 23))
        keep = u >= jnp.float32(dropout_p)
        out = jnp.where(keep, out * jnp.float32(1.0 / (1.0 - dropout_p)),
                        jnp.float32(0.0))

    o_ref[...] = out.astype(o_ref.dtype)


def learned_positional_embedding(x, weight, *, factor, dropout_p=0.1,
                                 residual=True, input_lens=None,
                                 use_dropout=True, seed=0, tile_t=None):
    B, T, D = x.shape
    V = weight.shape[0]
    assert T + 1 <= V, "sequence length exceeds positional-embedding table"

    # Time-tile size: largest multiple of 8 (or the full T) keeping one x/out
    # tile around ~2 MiB -> comfortably double-buffered inside the default
    # scoped VMEM on v5e/v6e/v7x while amortizing per-grid-step overhead.
    if tile_t is None:
        if T <= 8:
            tile_t = T
        else:
            bytes_per_row = D * max(jnp.dtype(x.dtype).itemsize, 4)
            tile_t = max(8, min(T, (2 << 20) // max(1, bytes_per_row)))
            tile_t = min(1024, (tile_t // 8) * 8)
            if T % tile_t != 0 and T % 8 == 0 and T <= 1024:
                tile_t = T          # avoid a partial trailing tile when cheap
    num_t_blocks = pl.cdiv(T, tile_t)

    # Structured position ids -> contiguous slab W[1:T+1] plus padding row W[0];
    # no (N,1) position array in HBM, no one-hot matmul, no x padding/copy.
    w_slab = jax.lax.slice_in_dim(weight, 1, T + 1, axis=0)      # (T, D)
    w0 = jax.lax.slice_in_dim(weight, 0, 1, axis=0)              # (1, D)

    if input_lens is not None:
        lens = input_lens.astype(jnp.int32).reshape(B)
    else:
        lens = jnp.full((B,), T, dtype=jnp.int32)
    seed_arr = jnp.asarray([seed], dtype=jnp.int32)

    out_dtype = x.dtype if residual else weight.dtype

    kernel = functools.partial(
        _lpe_kernel, factor=float(factor), dropout_p=float(dropout_p),
        use_dropout=bool(use_dropout), residual=bool(residual),
        tile_t=int(tile_t), total_t=int(T), d_model=int(D))

    in_specs = []
    operands = []
    if residual:  # skip the full x HBM read entirely in the non-residual path
        in_specs.append(pl.BlockSpec((None, tile_t, D),
                                     lambda j, b, *_: (b, j, 0)))
        operands.append(x)
    in_specs.append(pl.BlockSpec((tile_t, D), lambda j, b, *_: (j, 0)))   # W[1:T+1] tile
    operands.append(w_slab)
    in_specs.append(pl.BlockSpec((1, D), lambda j, b, *_: (0, 0)))        # W[0]
    operands.append(w0)

    out = pl.pallas_call(
        kernel,
        out_shape=jax.ShapeDtypeStruct((B, T, D), out_dtype),
        grid_spec=pltpu.PrefetchScalarGridSpec(
            num_scalar_prefetch=2,            # input_lens, seed -> SMEM
            grid=(num_t_blocks, B),           # time outer so the W-slab tile is
                                              # reused across consecutive batches
            in_specs=in_specs,
            out_specs=pl.BlockSpec((None, tile_t, D),
                                   lambda j, b, *_: (b, j, 0)),
        ),
        compiler_params=pltpu.CompilerParams(
            dimension_semantics=("parallel", "parallel")),
    )(lens, seed_arr, *operands)

    return out


if __name__ == "__main__":
    key = jax.random.PRNGKey(0)
    B, T, D = 2, 8, 32            # batch, seq, d_model
    max_len = 16
    V = max_len + 2               # nn.Embedding(max_len + 2, d_model)

    k_x, k_w = jax.random.split(key)
    x = jax.random.normal(k_x, (B, T, D), dtype=jnp.float32)
    weight = jax.random.normal(k_w, (V, D), dtype=jnp.float32)
    weight = weight.at[0].set(0.0)   # reset_parameters(): row 0 = 0

    factor = math.sqrt(D)
    input_lens = jnp.array([8, 5], dtype=jnp.int32)
    p = 0.1

    # Deterministic path + variable-length positions.
    out_eval = learned_positional_embedding(
        x, weight, factor=factor, dropout_p=p, residual=True,
        input_lens=input_lens, use_dropout=False)

    # Dropout (training) path, default positions 1..T.
    out_train = learned_positional_embedding(
        x, weight, factor=factor, dropout_p=p, residual=True,
        input_lens=None, use_dropout=True, seed=1234)

    # Non-residual path (embedding only).
    out_embed = learned_positional_embedding(
        x, weight, factor=factor, dropout_p=p, residual=False,
        input_lens=input_lens, use_dropout=False)

    jax.block_until_ready((out_eval, out_train, out_embed))

    # Reference checks (deterministic paths).
    t_idx = jnp.arange(1, T + 1, dtype=jnp.int32)[None, :]
    pos_ref = jnp.where(t_idx <= input_lens[:, None], t_idx, 0)
    ref_eval = weight[pos_ref] + x * factor
    assert jnp.allclose(out_eval, ref_eval, atol=1e-5, rtol=1e-5)
    assert jnp.allclose(out_embed, weight[pos_ref], atol=1e-5, rtol=1e-5)

    # Dropout path: every element is either 0 or ref / (1 - p).
    ref_train = weight[jnp.broadcast_to(t_idx, (B, T))] + x * factor
    scaled = ref_train / (1.0 - p)
    ok = (jnp.isclose(out_train, 0.0, atol=1e-6)
          | jnp.isclose(out_train, scaled, atol=1e-5, rtol=1e-5))
    assert bool(jnp.all(ok))
    assert out_train.shape == (B, T, D)
    assert out_train.dtype == x.dtype

    print("KERNEL_OK")
</pallas_src>

<mosaic_0001>
module attributes {stable_mosaic.version = 11 : i64} {
  func.func @_lpe_kernel(%arg0: i32, %arg1: i32, %arg2: memref<2xi32, #tpu.memory_space<smem>>, %arg3: memref<1xi32, #tpu.memory_space<smem>>, %arg4: memref<1x8x32xf32, #tpu.memory_space<vmem>>, %arg5: memref<8x32xf32, #tpu.memory_space<vmem>>, %arg6: memref<1x32xf32, #tpu.memory_space<vmem>>, %arg7: memref<1x8x32xf32, #tpu.memory_space<vmem>>) attributes {dimension_semantics = [#tpu.dimension_semantics<parallel>, #tpu.dimension_semantics<parallel>], iteration_bounds = array<i64: 1, 2>, scalar_prefetch = 2 : i64, scratch_operands = 0 : i64, tpu.core_type = #tpu.core_type<tc>, window_params = [{transform_indices = @transform_0, window_bounds = array<i64: 1, 8, 32>}, {transform_indices = @transform_1, window_bounds = array<i64: 8, 32>}, {pipeline_mode = #tpu.pipeline_mode<synchronous>, transform_indices = @transform_2, window_bounds = array<i64: 1, 32>}, {transform_indices = @transform_3, window_bounds = array<i64: 1, 8, 32>}]} {
    %c8_i32 = arith.constant 8 : i32
    %0 = arith.muli %arg0, %c8_i32 : i32
    %1 = arith.index_cast %arg1 : i32 to index
    %2 = memref.load %arg2[%1] : memref<2xi32, #tpu.memory_space<smem>>
    %3 = tpu.iota {dimensions = array<i32: 0>} : vector<8x1xi32>
    %4 = vector.broadcast %0 : i32 to vector<8x1xi32>
    %5 = arith.addi %3, %4 : vector<8x1xi32>
    %6 = vector.broadcast %2 : i32 to vector<8x1xi32>
    %7 = arith.cmpi slt, %5, %6 : vector<8x1xi32>
    %c0 = arith.constant 0 : index
    %c0_0 = arith.constant 0 : index
    %8 = vector.load %arg5[%c0, %c0_0] : memref<8x32xf32, #tpu.memory_space<vmem>>, vector<8x32xf32>
    %c0_1 = arith.constant 0 : index
    %c0_2 = arith.constant 0 : index
    %9 = vector.load %arg6[%c0_1, %c0_2] : memref<1x32xf32, #tpu.memory_space<vmem>>, vector<1x32xf32>
    %10 = vector.shape_cast %7 : vector<8x1xi1> to vector<8x1xi1>
    %11 = vector.broadcast %10 : vector<8x1xi1> to vector<8x32xi1>
    %12 = vector.shape_cast %9 : vector<1x32xf32> to vector<1x32xf32>
    %13 = vector.broadcast %12 : vector<1x32xf32> to vector<8x32xf32>
    %14 = arith.select %11, %8, %13 : vector<8x32xi1>, vector<8x32xf32>
    %c0_3 = arith.constant 0 : index
    %c0_4 = arith.constant 0 : index
    %c0_5 = arith.constant 0 : index
    %15 = vector.load %arg4[%c0_3, %c0_4, %c0_5] : memref<1x8x32xf32, #tpu.memory_space<vmem>>, vector<1x8x32xf32>
    %16 = vector.shape_cast %15 : vector<1x8x32xf32> to vector<8x32xf32>
    %cst = arith.constant 5.65685415 : f32
    %17 = vector.broadcast %cst : f32 to vector<8x32xf32>
    %18 = arith.mulf %17, %16 : vector<8x32xf32>
    %19 = arith.addf %14, %18 : vector<8x32xf32>
    %c0_6 = arith.constant 0 : index
    %c0_7 = arith.constant 0 : index
    %c0_8 = arith.constant 0 : index
    %20 = vector.load %arg7[%c0_6, %c0_7, %c0_8] : memref<1x8x32xf32, #tpu.memory_space<vmem>>, vector<1x8x32xf32>
    %21 = vector.shape_cast %20 : vector<1x8x32xf32> to vector<8x32xf32>
    %22 = vector.shape_cast %19 : vector<8x32xf32> to vector<1x8x32xf32>
    tpu.vector_store %arg7[%c0_6, %c0_7, %c0_8], %22 {strides = array<i32>} : memref<1x8x32xf32, #tpu.memory_space<vmem>>, vector<1x8x32xf32>,
    return
  }
  func.func @transform_0(%arg0: i32, %arg1: i32, %arg2: memref<2xi32, #tpu.memory_space<smem>>, %arg3: memref<1xi32, #tpu.memory_space<smem>>) -> (i32, i32, i32) {
    %c0_i32 = arith.constant 0 : i32
    %c0_i32_0 = arith.constant 0 : i32
    return %arg1, %arg0, %c0_i32 : i32, i32, i32
  }
  func.func @transform_1(%arg0: i32, %arg1: i32, %arg2: memref<2xi32, #tpu.memory_space<smem>>, %arg3: memref<1xi32, #tpu.memory_space<smem>>) -> (i32, i32) {
    %c0_i32 = arith.constant 0 : i32
    %c0_i32_0 = arith.constant 0 : i32
    return %arg0, %c0_i32 : i32, i32
  }
  func.func @transform_2(%arg0: i32, %arg1: i32, %arg2: memref<2xi32, #tpu.memory_space<smem>>, %arg3: memref<1xi32, #tpu.memory_space<smem>>) -> (i32, i32) {
    %c0_i32 = arith.constant 0 : i32
    %c0_i32_0 = arith.constant 0 : i32
    %c0_i32_1 = arith.constant 0 : i32
    return %c0_i32, %c0_i32_0 : i32, i32
  }
  func.func @transform_3(%arg0: i32, %arg1: i32, %arg2: memref<2xi32, #tpu.memory_space<smem>>, %arg3: memref<1xi32, #tpu.memory_space<smem>>) -> (i32, i32, i32) {
    %c0_i32 = arith.constant 0 : i32
    %c0_i32_0 = arith.constant 0 : i32
    return %arg1, %arg0, %c0_i32 : i32, i32, i32
  }
}

</mosaic_0001>

<llo_original>
// kernel: tpu_custom_call.1
$region0: #{tpu_custom_call.1}
  #allocation0 [shape = 'u32[]', space=smem, size = 0x4, offset = 0x4, fixed_abs, tag = 'smem constant byte address 0x4 - core index']
  #allocation1 [shape = 'u32[144,128]{1,0:T(1,128)}', space=vmem, size = 0x12000, scoped, tag = 'internal scratch']
  #allocation2 [shape = 's32[1]{0}', space=sflag, size = 0x4, scoped, tag = 'scoped memory for tpu_custom_call.1']
  #allocation3 [shape = 'u8[512]{0}', space=smem, size = 0x200, scoped, tag = 'prefetched SMEM operand 0']
  #allocation4 [shape = 's32[1]{0:T(128)S(6)}', space=smem, size = 0x200, scoped, tag = 'prefetched SMEM operand 1']
  %s0 = inlined_call_operand.vmem [shape: s32[2], index: 0, kind: input, shape index: {}]
  %s1 = inlined_call_operand.<no memory space> [shape: s32[1], index: 1, kind: input, shape index: {}]
  %s2 = inlined_call_operand.hbm [shape: f32[2,8,32], index: 2, kind: input, shape index: {}]
  %s3 = inlined_call_operand.hbm [shape: f32[8,32], index: 3, kind: input, shape index: {}]
  %s4 = inlined_call_operand.vmem [shape: f32[1,32], index: 4, kind: input, shape index: {}]
  %s5 = inlined_call_operand.hbm [shape: f32[2,8,32], index: 5, kind: output, shape index: {}]
  %s6 = sld [smem:[#allocation0]]
  $region53: #{tpu_custom_call.1} parent=0
    _
  %s8 = ssub.s32 1, %s6
  %s9 = scalar_select 0, %s8, %s6
  %s10 = sshll.u32 %s0, 4
  %s11 = int_to_ptr.vmem [resolvable:$true] %s10
  %13 = dma.vmem_to_smem %s11, 16, [#allocation3], [#allocation2]
  %14 = sst [smem:[#allocation4]] %s1
  %15 = dma.done [#allocation2], 16
  %16 = sfence
  $region1: #{tpu_custom_call.1} parent=0
    #allocation5 [shape = 'u8[8192]{0}', space=vmem, size = 0x2000, scoped, tag = 'input window, operand 2']
    #allocation6 [shape = 's32[2]{0}', space=sflag, size = 0x8, scoped, tag = 'scoped memory for tpu_custom_call.1']
    #allocation7 [shape = 's32[2]{0}', space=sflag, size = 0x8, scoped, tag = 'scoped memory for tpu_custom_call.1']
    #allocation8 [shape = 'u8[4096]{0}', space=vmem, size = 0x1000, scoped, tag = 'input window, operand 3, single buffered']
    #allocation9 [shape = 's32[1]{0}', space=sflag, size = 0x4, scoped, tag = 'scoped memory for tpu_custom_call.1']
    #allocation10 [shape = 'u8[8192]{0}', space=vmem, size = 0x2000, scoped, tag = 'output window, operand 0']
    %17 = vsyncpa [#allocation6], 0
    %s18 = scalar_lea.sflag [#allocation6], 1
    %19 = vsyncpa %s18, 0
    %20 = vsyncpa [#allocation9], 0
    %21 = vsyncpa [#allocation7], 0
    %s22 = scalar_lea.sflag [#allocation7], 1
    %23 = vsyncpa %s22, 0
    loop: start=0, step=1, limit=4
    $region2: #{tpu_custom_call.1} parent=1 // loop_pre_header
      _
    $region3: #{tpu_custom_call.1} parent=1 // loop_header
      %s25 = sphi 0, %s29
      %p26 = scmp.ge.s32.totalorder %s25, 4
      %s32 = sphi 0, %s44
      %s33 = sphi 0, %s40
      %s34 = sphi 0, %s32
      %s35 = sphi 0, %s33
      %s36 = sphi 0, %s34
      %s37 = sphi 0, %s35
      %s49 = sphi 0, %s51
      %s52 = sphi 0, %s49
      %s53 = sphi 0, %s52
      %s69 = sphi 0, %s53
      %s75 = sphi 0, %s77
      %s78 = sphi 0, %s75
      %s79 = sphi 0, %s78
      %s95 = sphi 0, %s79
      %s99 = sphi 0, %s99
      %s101 = sphi 0, %s99
      %s102 = sphi 0, %s101
      %s116 = sphi 0, %s102
      %s124 = sphi 0, %s126
      %s127 = sphi 0, %s124
      %s128 = sphi 0, %s127
      %s144 = sphi 0, %s128
    $region4: #{tpu_custom_call.1} parent=1 // loop_header_branch
      %28 = sbr.rel (%p26) target = $region8
    $region5: #{tpu_custom_call.1} parent=1 // loop_body
      %s30 = ssub.s32 %s25, 1
      %s31 = ssub.s32 %s25, 2
      %s38 = sadd.s32 1, %s33
      %p39 = scmp.ge.s32.totalorder %s38, 2
      %s40 = scalar_select %p39, 0, %s38
      %s41 = sadd.s32 1, %s32
      %s42 = scalar_select %p39, %s41, %s32
      %p43 = scmp.ge.s32.totalorder %s42, 1
      %s44 = scalar_select %p43, 0, %s42
      %s45 = ssub.s32 %s33, %s40
      %s46 = ssub.s32 %s32, %s44
      %s47 = sor.u32 %s45, %s46
      %p48 = scmp.eq.s32.totalorder %s47, 0
      %s50 = sadd.s32 %s49, 1
      %s51 = scalar_select %p48, %s49, %s50
      %p54 = pneg %p48
      %p55 = scmp.eq.s32.totalorder %s25, 1
      %p56 = por %p54, %p55
      %p57 = scmp.ne.s32.totalorder %s49, %s52
      %p58 = scmp.eq.s32.totalorder %s25, 0
      %p59 = por %p57, %p58
      %p60 = scmp.ne.s32.totalorder %s49, %s52
      %p61 = scmp.eq.s32.totalorder %s30, 1
      %p62 = por %p60, %p61
      %p63 = scmp.ne.s32.totalorder %s52, %s53
      %p64 = scmp.eq.s32.totalorder %s30, 0
      %p65 = por %p63, %p64
      %p66 = scmp.ne.s32.totalorder %s52, %s53
      %p67 = scmp.eq.s32.totalorder %s31, 1
      %p68 = por %p66, %p67
      %p70 = scmp.ne.s32.totalorder %s53, %s69
      %p71 = scmp.eq.s32.totalorder %s31, 0
      %p72 = por %p70, %p71
      %s73 = ssub.s32 %s32, %s44
      %p74 = scmp.eq.s32.totalorder %s73, 0
      %s76 = sadd.s32 %s75, 1
      %s77 = scalar_select %p74, %s75, %s76
      %p80 = pneg %p74
      %p81 = scmp.eq.s32.totalorder %s25, 1
      %p82 = por %p80, %p81
      %p83 = scmp.ne.s32.totalorder %s75, %s78
      %p84 = scmp.eq.s32.totalorder %s25, 0
      %p85 = por %p83, %p84
      %p86 = scmp.ne.s32.totalorder %s75, %s78
      %p87 = scmp.eq.s32.totalorder %s30, 1
      %p88 = por %p86, %p87
      %p89 = scmp.ne.s32.totalorder %s78, %s79
      %p90 = scmp.eq.s32.totalorder %s30, 0
      %p91 = por %p89, %p90
      %p92 = scmp.ne.s32.totalorder %s78, %s79
      %p93 = scmp.eq.s32.totalorder %s31, 1
      %p94 = por %p92, %p93
      %p96 = scmp.ne.s32.totalorder %s79, %s95
      %p97 = scmp.eq.s32.totalorder %s31, 0
      %p98 = por %p96, %p97
      %s100 = sadd.s32 %s99, 1
      %p103 = scmp.eq.s32.totalorder %s25, 1
      %p104 = scmp.ne.s32.totalorder %s99, %s101
      %p105 = scmp.eq.s32.totalorder %s25, 0
      %p106 = por %p104, %p105
      %p107 = scmp.ne.s32.totalorder %s99, %s101
      %p108 = scmp.eq.s32.totalorder %s30, 1
      %p109 = por %p107, %p108
      %p110 = scmp.ne.s32.totalorder %s101, %s102
      %p111 = scmp.eq.s32.totalorder %s30, 0
      %p112 = por %p110, %p111
      %p113 = scmp.ne.s32.totalorder %s101, %s102
      %p114 = scmp.eq.s32.totalorder %s31, 1
      %p115 = por %p113, %p114
      %p117 = scmp.ne.s32.totalorder %s102, %s116
      %p118 = scmp.eq.s32.totalorder %s31, 0
      %p119 = por %p117, %p118
      %s120 = ssub.s32 %s33, %s40
      %s121 = ssub.s32 %s32, %s44
      %s122 = sor.u32 %s120, %s121
      %p123 = scmp.eq.s32.totalorder %s122, 0
      %s125 = sadd.s32 %s124, 1
      %s126 = scalar_select %p123, %s124, %s125
      %p129 = pneg %p123
      %p130 = scmp.eq.s32.totalorder %s25, 1
      %p131 = por %p129, %p130
      %p132 = scmp.ne.s32.totalorder %s124, %s127
      %p133 = scmp.eq.s32.totalorder %s25, 0
      %p134 = por %p132, %p133
      %p135 = scmp.ne.s32.totalorder %s124, %s127
      %p136 = scmp.eq.s32.totalorder %s30, 1
      %p137 = por %p135, %p136
      %p138 = scmp.ne.s32.totalorder %s127, %s128
      %p139 = scmp.eq.s32.totalorder %s30, 0
      %p140 = por %p138, %p139
      %p141 = scmp.ne.s32.totalorder %s127, %s128
      %p142 = scmp.eq.s32.totalorder %s31, 1
      %p143 = por %p141, %p142
      %p145 = scmp.ne.s32.totalorder %s128, %s144
      %p146 = scmp.eq.s32.totalorder %s31, 0
      %p147 = por %p145, %p146
      %p148 = scmp.le.s32.totalorder 1, %s25
      %p149 = scmp.lt.s32.totalorder %s25, 3
      %p150 = pnand %p148, %p149
      %p151 = pneg %p150
      // Predicated region
      $region9: #{tpu_custom_call.1} parent=5 // pred_check
        _
      $region10: #{tpu_custom_call.1} parent=5 // pred_check_branch
        %153 = sbr.rel (%p150) target = $region12
      $region11: #{tpu_custom_call.1} parent=5 // pred_region
        %s154 = ssub.s32 %s25, 1
        // Predicated region
        $region13: #{tpu_custom_call.1} parent=11 // pred_check
          %p155 = pneg %p91
        $region14: #{tpu_custom_call.1} parent=11 // pred_check_branch
          %157 = sbr.rel (%p155) target = $region16
        $region15: #{tpu_custom_call.1} parent=11 // pred_region
          %s159 = ssub.s32 128, 128
          %160 = vsyncadd [#allocation9], %s159
          %s161 = smul.addr %s34, 128
          %s162 = scalar_lea.hbm %s3, %s161
          %s164 = sshll.u32 [#allocation8], 4
          %s165 = int_to_ptr.vmem [resolvable:$true] %s164
          %167 = dma.hbm_to_vmem [thread:$0]  %s162, 128, %s165, [#allocation9]
        $region16: #{tpu_custom_call.1} parent=11 // pred_fallthru
          _
        // Predicated region
        $region17: #{tpu_custom_call.1} parent=11 // pred_check
          %p168 = pneg %p112
        $region18: #{tpu_custom_call.1} parent=11 // pred_check_branch
          %170 = sbr.rel (%p168) target = $region20
        $region19: #{tpu_custom_call.1} parent=11 // pred_region
          _
        $region20: #{tpu_custom_call.1} parent=11 // pred_fallthru
          _
      $region12: #{tpu_custom_call.1} parent=5 // pred_fallthru
        _
      %p171 = scmp.lt.s32.totalorder %s25, 2
      // Predicated region
      $region21: #{tpu_custom_call.1} parent=5 // pred_check
        %p172 = pneg %p171
      $region22: #{tpu_custom_call.1} parent=5 // pred_check_branch
        %174 = sbr.rel (%p172) target = $region24
      $region23: #{tpu_custom_call.1} parent=5 // pred_region
        // Predicated region
        $region25: #{tpu_custom_call.1} parent=23 // pred_check
          %p175 = pneg %p59
        $region26: #{tpu_custom_call.1} parent=23 // pred_check_branch
          %177 = sbr.rel (%p175) target = $region28
        $region27: #{tpu_custom_call.1} parent=23 // pred_region
          %s178 = sand.u32 %s49, 1
          %s179 = scalar_lea.sflag [#allocation6], %s178
          %s180 = sand.u32 %s49, 1
          %s181 = smul.addr %s180, 8
          %s182 = scalar_lea.vmem [#allocation5], %s181
          %s184 = ssub.s32 128, 128
          %185 = vsyncadd %s179, %s184
          %s186 = sadd.s32 %s32, %s33
          %s187 = smul.addr %s186, 128
          %s188 = scalar_lea.hbm %s2, %s187
          %s190 = sshll.u32 %s182, 4
          %s191 = int_to_ptr.vmem [resolvable:$true] %s190
          %193 = dma.hbm_to_vmem [thread:$0]  %s188, 128, %s191, %s179
        $region28: #{tpu_custom_call.1} parent=23 // pred_fallthru
          _
      $region24: #{tpu_custom_call.1} parent=5 // pred_fallthru
        _
      %p194 = scmp.le.s32.totalorder 1, %s25
      %p195 = scmp.lt.s32.totalorder %s25, 3
      %p196 = pnand %p194, %p195
      %p197 = pneg %p196
      // Predicated region
      $region29: #{tpu_custom_call.1} parent=5 // pred_check
        _
      $region30: #{tpu_custom_call.1} parent=5 // pred_check_branch
        %199 = sbr.rel (%p196) target = $region32
      $region31: #{tpu_custom_call.1} parent=5 // pred_region
        %s200 = ssub.s32 %s25, 1
        %s201 = sand.u32 %s52, 1
        %s202 = scalar_lea.sflag [#allocation6], %s201
        %s203 = sand.u32 %s52, 1
        %s204 = smul.addr %s203, 8
        %s205 = scalar_lea.vmem [#allocation5], %s204
        // Predicated region
        $region33: #{tpu_custom_call.1} parent=31 // pred_check
          %p206 = pneg %p65
        $region34: #{tpu_custom_call.1} parent=31 // pred_check_branch
          %208 = sbr.rel (%p206) target = $region36
        $region35: #{tpu_custom_call.1} parent=31 // pred_region
          %209 = dma.done %s202, 128
        $region36: #{tpu_custom_call.1} parent=31 // pred_fallthru
          _
        // Predicated region
        $region37: #{tpu_custom_call.1} parent=31 // pred_check
          %p210 = pneg %p91
        $region38: #{tpu_custom_call.1} parent=31 // pred_check_branch
          %212 = sbr.rel (%p210) target = $region40
        $region39: #{tpu_custom_call.1} parent=31 // pred_region
          %213 = dma.done [#allocation9], 128
        $region40: #{tpu_custom_call.1} parent=31 // pred_fallthru
          _
        %s214 = sand.u32 %s52, 1
        %s215 = scalar_lea.sflag [#allocation6], %s214
        %s216 = sand.u32 %s52, 1
        %s217 = smul.addr %s216, 8
        %s218 = scalar_lea.vmem [#allocation5], %s217
        %p219 = pneg %p65
        %p220 = pneg %p62
        %p221 = pneg %p91
        %p222 = pneg %p88
        %p223 = pneg %p112
        %p224 = pneg %p109
        %p225 = pneg %p140
        %p226 = pneg %p137
        %s227 = sand.u32 %s127, 1
        %s228 = scalar_lea.sflag [#allocation7], %s227
        %s229 = sand.u32 %s127, 1
        %s230 = smul.addr %s229, 8
        %s231 = scalar_lea.vmem [#allocation10], %s230
        %s232 = smul.u32 %s34, 8
        %s233 = sld [smem:[#allocation3 + %s35]]
        %v234 = vlaneseq
        %v235 = vshrl.u32 %v234, 7
        %v236 = vstv %s232
        %v237 = vadd.s32 %v235, %v236
        %v238 = vstv %s233
        %vm239 = vcmp.lt.s32.totalorder %v237, %v238
        %v240 = vld [vmem:[#allocation8] sm:$0xff]
        %v241 = vld [vmem:[%s4] sm:$0x1]
        %v242 = vsel %vm239, 1, 0
        %vm243 = vcmp.eq.s32.totalorder %v242, 1
        %v245 = vlaneseq
        %v246 = vshrl.u32 %v245, 7
        %v247 = vsub.s32 0, %v246
        %v248 = vrot.slane %v241, %v247
        %v250 = vsel %vm243, %v240, %v248
        %v251 = vld [vmem:[%s205] sm:$0xff]
        %v252 = vmul.f32 %v251, 5.656854
        %v253 = vadd.f32 %v250, %v252
        %vm254 = vcmask 261120
        %255 = vst.msk [vmem:[%s231] sm:$0xff] %vm254, %v253
        %s256 = sand.u32 %s127, 1
        %s257 = scalar_lea.sflag [#allocation7], %s256
        %s258 = sand.u32 %s127, 1
        %s259 = smul.addr %s258, 8
        %s260 = scalar_lea.vmem [#allocation10], %s259
        // Predicated region
        $region41: #{tpu_custom_call.1} parent=31 // pred_check
          %p261 = pneg %p137
        $region42: #{tpu_custom_call.1} parent=31 // pred_check_branch
          %263 = sbr.rel (%p261) target = $region44
        $region43: #{tpu_custom_call.1} parent=31 // pred_region
          %s265 = ssub.s32 128, 128
          %266 = vsyncadd %s257, %s265
          %s267 = sadd.s32 %s34, %s35
          %s268 = smul.addr %s267, 128
          %s269 = scalar_lea.hbm %s5, %s268
          %s271 = sshll.u32 %s260, 4
          %s272 = int_to_ptr.vmem [resolvable:$true] %s271
          %274 = dma.vmem_to_hbm [thread:$0]  %s272, 128, %s269, %s257
        $region44: #{tpu_custom_call.1} parent=31 // pred_fallthru
          _
      $region32: #{tpu_custom_call.1} parent=5 // pred_fallthru
        _
      %p275 = scmp.le.s32.totalorder 2, %s25
      // Predicated region
      $region45: #{tpu_custom_call.1} parent=5 // pred_check
        %p276 = pneg %p275
      $region46: #{tpu_custom_call.1} parent=5 // pred_check_branch
        %278 = sbr.rel (%p276) target = $region48
      $region47: #{tpu_custom_call.1} parent=5 // pred_region
        %s279 = ssub.s32 %s25, 2
        // Predicated region
        $region49: #{tpu_custom_call.1} parent=47 // pred_check
          %p280 = pneg %p143
        $region50: #{tpu_custom_call.1} parent=47 // pred_check_branch
          %282 = sbr.rel (%p280) target = $region52
        $region51: #{tpu_custom_call.1} parent=47 // pred_region
          %s283 = sand.u32 %s128, 1
          %s284 = scalar_lea.sflag [#allocation7], %s283
          %s285 = sand.u32 %s128, 1
          %s286 = smul.addr %s285, 8
          %s287 = scalar_lea.vmem [#allocation10], %s286
          %288 = dma.done %s284, 128
        $region52: #{tpu_custom_call.1} parent=47 // pred_fallthru
          _
      $region48: #{tpu_custom_call.1} parent=5 // pred_fallthru
        _
    $region6: #{tpu_custom_call.1} parent=1 // loop_footer
      %s29 = sadd.s32 1, %s25
    $region7: #{tpu_custom_call.1} parent=1 // loop_footer_branch
      %24 = sbr.rel target = $region3
    $region8: #{tpu_custom_call.1} parent=1 // loop_exit
      _
    %289 = vsyncpa [#allocation6], 1
    %s290 = scalar_lea.sflag [#allocation6], 1
    %291 = vsyncpa %s290, 1
    %292 = vsyncpa [#allocation9], 1
    %293 = vsyncpa [#allocation7], 1
    %s294 = scalar_lea.sflag [#allocation7], 1
    %295 = vsyncpa %s294, 1

</llo_original>
